<compile_context>
chip_gen: v7x
topology: tpu7x:2x2x1
jax: 0.10.0
libtpu: 0.0.40
codegen_flags: <defaults>
</compile_context>

<pallas_src>
import jax
import jax.numpy as jnp
from jax.experimental import pallas as pl
from jax.experimental.pallas import tpu as pltpu

NEGATIVE_SLOPE = 0.5


def _conv1x1_where_kernel(x_ref, w_ref, b_ref, o_ref, xp_ref):
    # x_ref : (1, C_in, H, W)       VMEM (unpadded input, full spatial block)
    # w_ref : (C_out, C_in)         SMEM (scalar weights)
    # b_ref : (C_out,)              SMEM (scalar bias)
    # o_ref : (1, CO_BLK, Hp, Wp)   VMEM (padded output block)
    # xp_ref: (C_in, Hp, Wp)        VMEM scratch (zero-padded input tile)
    _, c_in, h, w = x_ref.shape
    _, co_blk, hp, wp = o_ref.shape
    p = (hp - h) // 2
    j = pl.program_id(1)                       # C_out-group index

    # Build the zero-padded input tile in VMEM only (static-offset window
    # store); the padded copy never exists in HBM.  Border pixels stay 0, so
    # the conv there reduces to just the bias — exactly the padded-conv value.
    xp_ref[...] = jnp.zeros_like(xp_ref)
    xp_ref[:, p:p + h, p:p + w] = x_ref[0]

    for o in range(co_blk):                    # static unroll (C_out <= 8)
        oc = j * co_blk + o
        v1 = jnp.zeros((hp, wp), jnp.float32)
        for c in range(c_in):                  # static unroll (C_in == 3): VPU only
            v1 = v1 + w_ref[oc, c] * xp_ref[c]
        v1 = v1 + b_ref[oc]
        # v3 = v1 * 0 ; v4 = v1 * negative_slope ; v5 = where(v4, v1, v3)
        # TODO(synk): torch.where with a float condition raises in modern
        # PyTorch; "nonzero is true" semantics are used here and in the ref.
        v4 = v1 * NEGATIVE_SLOPE
        o_ref[0, o] = jnp.where(v4 != 0.0, v1, 0.0).astype(o_ref.dtype)


def conv1x1_where(x_nchw, weight, bias, padding=1):
    """x_nchw: (N, C_in, H, W) f32; weight: (C_out, C_in); bias: (C_out,)."""
    n, c_in, h, w = x_nchw.shape
    c_out = weight.shape[0]
    hp, wp = h + 2 * padding, w + 2 * padding

    # Guarantee >=2 "parallel" grid steps so both v7x TensorCores get work even
    # when N == 1 (split the output-channel axis in that case).
    co_blk = c_out if n >= 2 else (c_out // 2 if c_out % 2 == 0 else c_out)
    grid = (n, c_out // co_blk)

    itemsize = 4
    cost = pl.CostEstimate(
        flops=2 * n * hp * wp * c_in * c_out,
        transcendentals=0,
        bytes_accessed=(n * c_in * h * w + n * c_out * hp * wp
                        + weight.size + bias.size) * itemsize)

    # VMEM per step: x block + padded-output block + scratch, double buffered
    # (well under 1 MiB at these channel counts) — no VMEM pressure on any gen.
    return pl.pallas_call(
        _conv1x1_where_kernel,
        out_shape=jax.ShapeDtypeStruct((n, c_out, hp, wp), jnp.float32),
        grid=grid,
        in_specs=[
            pl.BlockSpec((1, c_in, h, w), lambda i, j: (i, 0, 0, 0)),
            pl.BlockSpec(memory_space=pltpu.MemorySpace.SMEM),   # weight scalars
            pl.BlockSpec(memory_space=pltpu.MemorySpace.SMEM),   # bias scalars
        ],
        out_specs=pl.BlockSpec((1, co_blk, hp, wp), lambda i, j: (i, j, 0, 0)),
        scratch_shapes=[pltpu.VMEM((c_in, hp, wp), jnp.float32)],
        compiler_params=pltpu.CompilerParams(
            dimension_semantics=("parallel", "parallel")),
        cost_estimate=cost,
    )(x_nchw, weight, bias)


def reference(x_nchw, weight, bias, padding=1):
    # Pure-JAX reference keeping the full v3/v4/v5 chain of the module.
    x_pad = jnp.pad(
        x_nchw, ((0, 0), (0, 0), (padding, padding), (padding, padding)))
    v1 = jnp.einsum('nchw,oc->nohw', x_pad, weight) + bias[None, :, None, None]
    v3 = v1 * 0.0
    v4 = v1 * NEGATIVE_SLOPE
    return jnp.where(v4 != 0.0, v1, v3)


if __name__ == "__main__":
    key = jax.random.PRNGKey(0)
    kx, kw, kb, kx1 = jax.random.split(key, 4)

    # small shapes consistent with Conv2d(3, 8, 1, stride=1, padding=1)
    N, C_IN, H, W = 2, 3, 16, 16
    C_OUT = 8

    x = jax.random.normal(kx, (N, C_IN, H, W), dtype=jnp.float32)
    # deterministic parameter init (Kaiming-uniform-ish bound for a 1x1 conv)
    bound = 1.0 / (C_IN ** 0.5)
    weight = jax.random.uniform(kw, (C_OUT, C_IN), jnp.float32, -bound, bound)
    bias = jax.random.uniform(kb, (C_OUT,), jnp.float32, -bound, bound)

    out = jax.block_until_ready(conv1x1_where(x, weight, bias))
    ref = reference(x, weight, bias)
    assert out.shape == (N, C_OUT, H + 2, W + 2), out.shape
    assert jnp.allclose(out, ref, atol=1e-5, rtol=1e-5), "mismatch vs reference"

    # N == 1 path: C_out split into two parallel grid steps (v7x megacore).
    x1 = jax.random.normal(kx1, (1, C_IN, 8, 8), dtype=jnp.float32)
    out1 = jax.block_until_ready(conv1x1_where(x1, weight, bias))
    ref1 = reference(x1, weight, bias)
    assert jnp.allclose(out1, ref1, atol=1e-5, rtol=1e-5), "mismatch (N=1)"

    print("KERNEL_OK")
</pallas_src>

<mosaic_0001>
module attributes {stable_mosaic.version = 11 : i64} {
  func.func @_conv1x1_where_kernel(%arg0: i32, %arg1: i32, %arg2: memref<1x3x16x16xf32, #tpu.memory_space<vmem>>, %arg3: memref<8x3xf32, #tpu.memory_space<smem>>, %arg4: memref<8xf32, #tpu.memory_space<smem>>, %arg5: memref<1x8x18x18xf32, #tpu.memory_space<vmem>>, %arg6: memref<3x18x18xf32, #tpu.memory_space<vmem>>) attributes {dimension_semantics = [#tpu.dimension_semantics<parallel>, #tpu.dimension_semantics<parallel>], iteration_bounds = array<i64: 2, 1>, scalar_prefetch = 0 : i64, scratch_operands = 1 : i64, tpu.core_type = #tpu.core_type<tc>, window_params = [{transform_indices = @transform_0, window_bounds = array<i64: 1, 3, 16, 16>}, {transform_indices = @transform_1, window_bounds = array<i64: 8, 3>}, {transform_indices = @transform_2, window_bounds = array<i64: 8>}, {transform_indices = @transform_3, window_bounds = array<i64: 1, 8, 18, 18>}]} {
    %cst = arith.constant 0.000000e+00 : f32
    %0 = vector.broadcast %cst : f32 to vector<3x18x18xf32>
    %c0 = arith.constant 0 : index
    %c0_0 = arith.constant 0 : index
    %c0_1 = arith.constant 0 : index
    %1 = vector.load %arg6[%c0, %c0_0, %c0_1] : memref<3x18x18xf32, #tpu.memory_space<vmem>>, vector<3x18x18xf32>
    tpu.vector_store %arg6[%c0, %c0_0, %c0_1], %0 {strides = array<i32>} : memref<3x18x18xf32, #tpu.memory_space<vmem>>, vector<3x18x18xf32>,
    %c0_2 = arith.constant 0 : index
    %c0_3 = arith.constant 0 : index
    %c0_4 = arith.constant 0 : index
    %c0_5 = arith.constant 0 : index
    %2 = vector.load %arg2[%c0_2, %c0_3, %c0_4, %c0_5] : memref<1x3x16x16xf32, #tpu.memory_space<vmem>>, vector<1x3x16x16xf32>
    %3 = vector.shape_cast %2 : vector<1x3x16x16xf32> to vector<3x16x16xf32>
    %c0_6 = arith.constant 0 : index
    %c1 = arith.constant 1 : index
    %c1_7 = arith.constant 1 : index
    %4 = vector.load %arg6[%c0_6, %c1, %c1_7] : memref<3x18x18xf32, #tpu.memory_space<vmem>>, vector<3x16x16xf32>
    tpu.vector_store %arg6[%c0_6, %c1, %c1_7], %3 {strides = array<i32>} : memref<3x18x18xf32, #tpu.memory_space<vmem>>, vector<3x16x16xf32>,
    %c8_i32 = arith.constant 8 : i32
    %5 = arith.muli %arg1, %c8_i32 : i32
    %c0_i32 = arith.constant 0 : i32
    %6 = arith.addi %5, %c0_i32 : i32
    %cst_8 = arith.constant 0.000000e+00 : f32
    %7 = vector.broadcast %cst_8 : f32 to vector<18x18xf32>
    %8 = arith.index_cast %6 : i32 to index
    %c0_9 = arith.constant 0 : index
    %9 = memref.load %arg3[%8, %c0_9] : memref<8x3xf32, #tpu.memory_space<smem>>
    %c0_10 = arith.constant 0 : index
    %c0_11 = arith.constant 0 : index
    %c0_12 = arith.constant 0 : index
    %10 = vector.load %arg6[%c0_10, %c0_11, %c0_12] : memref<3x18x18xf32, #tpu.memory_space<vmem>>, vector<1x18x18xf32>
    %11 = vector.shape_cast %10 : vector<1x18x18xf32> to vector<18x18xf32>
    %12 = vector.broadcast %9 : f32 to vector<18x18xf32>
    %13 = arith.mulf %12, %11 : vector<18x18xf32>
    %14 = arith.addf %7, %13 : vector<18x18xf32>
    %15 = arith.index_cast %6 : i32 to index
    %c1_13 = arith.constant 1 : index
    %16 = memref.load %arg3[%15, %c1_13] : memref<8x3xf32, #tpu.memory_space<smem>>
    %c1_14 = arith.constant 1 : index
    %c0_15 = arith.constant 0 : index
    %c0_16 = arith.constant 0 : index
    %17 = vector.load %arg6[%c1_14, %c0_15, %c0_16] : memref<3x18x18xf32, #tpu.memory_space<vmem>>, vector<1x18x18xf32>
    %18 = vector.shape_cast %17 : vector<1x18x18xf32> to vector<18x18xf32>
    %19 = vector.broadcast %16 : f32 to vector<18x18xf32>
    %20 = arith.mulf %19, %18 : vector<18x18xf32>
    %21 = arith.addf %14, %20 : vector<18x18xf32>
    %22 = arith.index_cast %6 : i32 to index
    %c2 = arith.constant 2 : index
    %23 = memref.load %arg3[%22, %c2] : memref<8x3xf32, #tpu.memory_space<smem>>
    %c2_17 = arith.constant 2 : index
    %c0_18 = arith.constant 0 : index
    %c0_19 = arith.constant 0 : index
    %24 = vector.load %arg6[%c2_17, %c0_18, %c0_19] : memref<3x18x18xf32, #tpu.memory_space<vmem>>, vector<1x18x18xf32>
    %25 = vector.shape_cast %24 : vector<1x18x18xf32> to vector<18x18xf32>
    %26 = vector.broadcast %23 : f32 to vector<18x18xf32>
    %27 = arith.mulf %26, %25 : vector<18x18xf32>
    %28 = arith.addf %21, %27 : vector<18x18xf32>
    %29 = arith.index_cast %6 : i32 to index
    %30 = memref.load %arg4[%29] : memref<8xf32, #tpu.memory_space<smem>>
    %31 = vector.broadcast %30 : f32 to vector<18x18xf32>
    %32 = arith.addf %28, %31 : vector<18x18xf32>
    %cst_20 = arith.constant 5.000000e-01 : f32
    %33 = vector.broadcast %cst_20 : f32 to vector<18x18xf32>
    %34 = arith.mulf %32, %33 : vector<18x18xf32>
    %cst_21 = arith.constant 0.000000e+00 : f32
    %35 = vector.broadcast %cst_21 : f32 to vector<18x18xf32>
    %36 = arith.cmpf one, %34, %35 : vector<18x18xf32>
    %cst_22 = arith.constant 0.000000e+00 : f32
    %37 = vector.broadcast %cst_22 : f32 to vector<18x18xf32>
    %38 = arith.select %36, %32, %37 : vector<18x18xi1>, vector<18x18xf32>
    %c0_23 = arith.constant 0 : index
    %c0_24 = arith.constant 0 : index
    %c0_25 = arith.constant 0 : index
    %c0_26 = arith.constant 0 : index
    %39 = vector.load %arg5[%c0_23, %c0_24, %c0_25, %c0_26] : memref<1x8x18x18xf32, #tpu.memory_space<vmem>>, vector<1x1x18x18xf32>
    %40 = vector.shape_cast %39 : vector<1x1x18x18xf32> to vector<18x18xf32>
    %41 = vector.shape_cast %38 : vector<18x18xf32> to vector<1x1x18x18xf32>
    tpu.vector_store %arg5[%c0_23, %c0_24, %c0_25, %c0_26], %41 {strides = array<i32>} : memref<1x8x18x18xf32, #tpu.memory_space<vmem>>, vector<1x1x18x18xf32>,
    %c8_i32_27 = arith.constant 8 : i32
    %42 = arith.muli %arg1, %c8_i32_27 : i32
    %c1_i32 = arith.constant 1 : i32
    %43 = arith.addi %42, %c1_i32 : i32
    %cst_28 = arith.constant 0.000000e+00 : f32
    %44 = vector.broadcast %cst_28 : f32 to vector<18x18xf32>
    %45 = arith.index_cast %43 : i32 to index
    %c0_29 = arith.constant 0 : index
    %46 = memref.load %arg3[%45, %c0_29] : memref<8x3xf32, #tpu.memory_space<smem>>
    %c0_30 = arith.constant 0 : index
    %c0_31 = arith.constant 0 : index
    %c0_32 = arith.constant 0 : index
    %47 = vector.load %arg6[%c0_30, %c0_31, %c0_32] : memref<3x18x18xf32, #tpu.memory_space<vmem>>, vector<1x18x18xf32>
    %48 = vector.shape_cast %47 : vector<1x18x18xf32> to vector<18x18xf32>
    %49 = vector.broadcast %46 : f32 to vector<18x18xf32>
    %50 = arith.mulf %49, %48 : vector<18x18xf32>
    %51 = arith.addf %44, %50 : vector<18x18xf32>
    %52 = arith.index_cast %43 : i32 to index
    %c1_33 = arith.constant 1 : index
    %53 = memref.load %arg3[%52, %c1_33] : memref<8x3xf32, #tpu.memory_space<smem>>
    %c1_34 = arith.constant 1 : index
    %c0_35 = arith.constant 0 : index
    %c0_36 = arith.constant 0 : index
    %54 = vector.load %arg6[%c1_34, %c0_35, %c0_36] : memref<3x18x18xf32, #tpu.memory_space<vmem>>, vector<1x18x18xf32>
    %55 = vector.shape_cast %54 : vector<1x18x18xf32> to vector<18x18xf32>
    %56 = vector.broadcast %53 : f32 to vector<18x18xf32>
    %57 = arith.mulf %56, %55 : vector<18x18xf32>
    %58 = arith.addf %51, %57 : vector<18x18xf32>
    %59 = arith.index_cast %43 : i32 to index
    %c2_37 = arith.constant 2 : index
    %60 = memref.load %arg3[%59, %c2_37] : memref<8x3xf32, #tpu.memory_space<smem>>
    %c2_38 = arith.constant 2 : index
    %c0_39 = arith.constant 0 : index
    %c0_40 = arith.constant 0 : index
    %61 = vector.load %arg6[%c2_38, %c0_39, %c0_40] : memref<3x18x18xf32, #tpu.memory_space<vmem>>, vector<1x18x18xf32>
    %62 = vector.shape_cast %61 : vector<1x18x18xf32> to vector<18x18xf32>
    %63 = vector.broadcast %60 : f32 to vector<18x18xf32>
    %64 = arith.mulf %63, %62 : vector<18x18xf32>
    %65 = arith.addf %58, %64 : vector<18x18xf32>
    %66 = arith.index_cast %43 : i32 to index
    %67 = memref.load %arg4[%66] : memref<8xf32, #tpu.memory_space<smem>>
    %68 = vector.broadcast %67 : f32 to vector<18x18xf32>
    %69 = arith.addf %65, %68 : vector<18x18xf32>
    %cst_41 = arith.constant 5.000000e-01 : f32
    %70 = vector.broadcast %cst_41 : f32 to vector<18x18xf32>
    %71 = arith.mulf %69, %70 : vector<18x18xf32>
    %cst_42 = arith.constant 0.000000e+00 : f32
    %72 = vector.broadcast %cst_42 : f32 to vector<18x18xf32>
    %73 = arith.cmpf one, %71, %72 : vector<18x18xf32>
    %cst_43 = arith.constant 0.000000e+00 : f32
    %74 = vector.broadcast %cst_43 : f32 to vector<18x18xf32>
    %75 = arith.select %73, %69, %74 : vector<18x18xi1>, vector<18x18xf32>
    %c0_44 = arith.constant 0 : index
    %c1_45 = arith.constant 1 : index
    %c0_46 = arith.constant 0 : index
    %c0_47 = arith.constant 0 : index
    %76 = vector.load %arg5[%c0_44, %c1_45, %c0_46, %c0_47] : memref<1x8x18x18xf32, #tpu.memory_space<vmem>>, vector<1x1x18x18xf32>
    %77 = vector.shape_cast %76 : vector<1x1x18x18xf32> to vector<18x18xf32>
    %78 = vector.shape_cast %75 : vector<18x18xf32> to vector<1x1x18x18xf32>
    tpu.vector_store %arg5[%c0_44, %c1_45, %c0_46, %c0_47], %78 {strides = array<i32>} : memref<1x8x18x18xf32, #tpu.memory_space<vmem>>, vector<1x1x18x18xf32>,
    %c8_i32_48 = arith.constant 8 : i32
    %79 = arith.muli %arg1, %c8_i32_48 : i32
    %c2_i32 = arith.constant 2 : i32
    %80 = arith.addi %79, %c2_i32 : i32
    %cst_49 = arith.constant 0.000000e+00 : f32
    %81 = vector.broadcast %cst_49 : f32 to vector<18x18xf32>
    %82 = arith.index_cast %80 : i32 to index
    %c0_50 = arith.constant 0 : index
    %83 = memref.load %arg3[%82, %c0_50] : memref<8x3xf32, #tpu.memory_space<smem>>
    %c0_51 = arith.constant 0 : index
    %c0_52 = arith.constant 0 : index
    %c0_53 = arith.constant 0 : index
    %84 = vector.load %arg6[%c0_51, %c0_52, %c0_53] : memref<3x18x18xf32, #tpu.memory_space<vmem>>, vector<1x18x18xf32>
    %85 = vector.shape_cast %84 : vector<1x18x18xf32> to vector<18x18xf32>
    %86 = vector.broadcast %83 : f32 to vector<18x18xf32>
    %87 = arith.mulf %86, %85 : vector<18x18xf32>
    %88 = arith.addf %81, %87 : vector<18x18xf32>
    %89 = arith.index_cast %80 : i32 to index
    %c1_54 = arith.constant 1 : index
    %90 = memref.load %arg3[%89, %c1_54] : memref<8x3xf32, #tpu.memory_space<smem>>
    %c1_55 = arith.constant 1 : index
    %c0_56 = arith.constant 0 : index
    %c0_57 = arith.constant 0 : index
    %91 = vector.load %arg6[%c1_55, %c0_56, %c0_57] : memref<3x18x18xf32, #tpu.memory_space<vmem>>, vector<1x18x18xf32>
    %92 = vector.shape_cast %91 : vector<1x18x18xf32> to vector<18x18xf32>
    %93 = vector.broadcast %90 : f32 to vector<18x18xf32>
    %94 = arith.mulf %93, %92 : vector<18x18xf32>
    %95 = arith.addf %88, %94 : vector<18x18xf32>
    %96 = arith.index_cast %80 : i32 to index
    %c2_58 = arith.constant 2 : index
    %97 = memref.load %arg3[%96, %c2_58] : memref<8x3xf32, #tpu.memory_space<smem>>
    %c2_59 = arith.constant 2 : index
    %c0_60 = arith.constant 0 : index
    %c0_61 = arith.constant 0 : index
    %98 = vector.load %arg6[%c2_59, %c0_60, %c0_61] : memref<3x18x18xf32, #tpu.memory_space<vmem>>, vector<1x18x18xf32>
    %99 = vector.shape_cast %98 : vector<1x18x18xf32> to vector<18x18xf32>
    %100 = vector.broadcast %97 : f32 to vector<18x18xf32>
    %101 = arith.mulf %100, %99 : vector<18x18xf32>
    %102 = arith.addf %95, %101 : vector<18x18xf32>
    %103 = arith.index_cast %80 : i32 to index
    %104 = memref.load %arg4[%103] : memref<8xf32, #tpu.memory_space<smem>>
    %105 = vector.broadcast %104 : f32 to vector<18x18xf32>
    %106 = arith.addf %102, %105 : vector<18x18xf32>
    %cst_62 = arith.constant 5.000000e-01 : f32
    %107 = vector.broadcast %cst_62 : f32 to vector<18x18xf32>
    %108 = arith.mulf %106, %107 : vector<18x18xf32>
    %cst_63 = arith.constant 0.000000e+00 : f32
    %109 = vector.broadcast %cst_63 : f32 to vector<18x18xf32>
    %110 = arith.cmpf one, %108, %109 : vector<18x18xf32>
    %cst_64 = arith.constant 0.000000e+00 : f32
    %111 = vector.broadcast %cst_64 : f32 to vector<18x18xf32>
    %112 = arith.select %110, %106, %111 : vector<18x18xi1>, vector<18x18xf32>
    %c0_65 = arith.constant 0 : index
    %c2_66 = arith.constant 2 : index
    %c0_67 = arith.constant 0 : index
    %c0_68 = arith.constant 0 : index
    %113 = vector.load %arg5[%c0_65, %c2_66, %c0_67, %c0_68] : memref<1x8x18x18xf32, #tpu.memory_space<vmem>>, vector<1x1x18x18xf32>
    %114 = vector.shape_cast %113 : vector<1x1x18x18xf32> to vector<18x18xf32>
    %115 = vector.shape_cast %112 : vector<18x18xf32> to vector<1x1x18x18xf32>
    tpu.vector_store %arg5[%c0_65, %c2_66, %c0_67, %c0_68], %115 {strides = array<i32>} : memref<1x8x18x18xf32, #tpu.memory_space<vmem>>, vector<1x1x18x18xf32>,
    %c8_i32_69 = arith.constant 8 : i32
    %116 = arith.muli %arg1, %c8_i32_69 : i32
    %c3_i32 = arith.constant 3 : i32
    %117 = arith.addi %116, %c3_i32 : i32
    %cst_70 = arith.constant 0.000000e+00 : f32
    %118 = vector.broadcast %cst_70 : f32 to vector<18x18xf32>
    %119 = arith.index_cast %117 : i32 to index
    %c0_71 = arith.constant 0 : index
    %120 = memref.load %arg3[%119, %c0_71] : memref<8x3xf32, #tpu.memory_space<smem>>
    %c0_72 = arith.constant 0 : index
    %c0_73 = arith.constant 0 : index
    %c0_74 = arith.constant 0 : index
    %121 = vector.load %arg6[%c0_72, %c0_73, %c0_74] : memref<3x18x18xf32, #tpu.memory_space<vmem>>, vector<1x18x18xf32>
    %122 = vector.shape_cast %121 : vector<1x18x18xf32> to vector<18x18xf32>
    %123 = vector.broadcast %120 : f32 to vector<18x18xf32>
    %124 = arith.mulf %123, %122 : vector<18x18xf32>
    %125 = arith.addf %118, %124 : vector<18x18xf32>
    %126 = arith.index_cast %117 : i32 to index
    %c1_75 = arith.constant 1 : index
    %127 = memref.load %arg3[%126, %c1_75] : memref<8x3xf32, #tpu.memory_space<smem>>
    %c1_76 = arith.constant 1 : index
    %c0_77 = arith.constant 0 : index
    %c0_78 = arith.constant 0 : index
    %128 = vector.load %arg6[%c1_76, %c0_77, %c0_78] : memref<3x18x18xf32, #tpu.memory_space<vmem>>, vector<1x18x18xf32>
    %129 = vector.shape_cast %128 : vector<1x18x18xf32> to vector<18x18xf32>
    %130 = vector.broadcast %127 : f32 to vector<18x18xf32>
    %131 = arith.mulf %130, %129 : vector<18x18xf32>
    %132 = arith.addf %125, %131 : vector<18x18xf32>
    %133 = arith.index_cast %117 : i32 to index
    %c2_79 = arith.constant 2 : index
    %134 = memref.load %arg3[%133, %c2_79] : memref<8x3xf32, #tpu.memory_space<smem>>
    %c2_80 = arith.constant 2 : index
    %c0_81 = arith.constant 0 : index
    %c0_82 = arith.constant 0 : index
    %135 = vector.load %arg6[%c2_80, %c0_81, %c0_82] : memref<3x18x18xf32, #tpu.memory_space<vmem>>, vector<1x18x18xf32>
    %136 = vector.shape_cast %135 : vector<1x18x18xf32> to vector<18x18xf32>
    %137 = vector.broadcast %134 : f32 to vector<18x18xf32>
    %138 = arith.mulf %137, %136 : vector<18x18xf32>
    %139 = arith.addf %132, %138 : vector<18x18xf32>
    %140 = arith.index_cast %117 : i32 to index
    %141 = memref.load %arg4[%140] : memref<8xf32, #tpu.memory_space<smem>>
    %142 = vector.broadcast %141 : f32 to vector<18x18xf32>
    %143 = arith.addf %139, %142 : vector<18x18xf32>
    %cst_83 = arith.constant 5.000000e-01 : f32
    %144 = vector.broadcast %cst_83 : f32 to vector<18x18xf32>
    %145 = arith.mulf %143, %144 : vector<18x18xf32>
    %cst_84 = arith.constant 0.000000e+00 : f32
    %146 = vector.broadcast %cst_84 : f32 to vector<18x18xf32>
    %147 = arith.cmpf one, %145, %146 : vector<18x18xf32>
    %cst_85 = arith.constant 0.000000e+00 : f32
    %148 = vector.broadcast %cst_85 : f32 to vector<18x18xf32>
    %149 = arith.select %147, %143, %148 : vector<18x18xi1>, vector<18x18xf32>
    %c0_86 = arith.constant 0 : index
    %c3 = arith.constant 3 : index
    %c0_87 = arith.constant 0 : index
    %c0_88 = arith.constant 0 : index
    %150 = vector.load %arg5[%c0_86, %c3, %c0_87, %c0_88] : memref<1x8x18x18xf32, #tpu.memory_space<vmem>>, vector<1x1x18x18xf32>
    %151 = vector.shape_cast %150 : vector<1x1x18x18xf32> to vector<18x18xf32>
    %152 = vector.shape_cast %149 : vector<18x18xf32> to vector<1x1x18x18xf32>
    tpu.vector_store %arg5[%c0_86, %c3, %c0_87, %c0_88], %152 {strides = array<i32>} : memref<1x8x18x18xf32, #tpu.memory_space<vmem>>, vector<1x1x18x18xf32>,
    %c8_i32_89 = arith.constant 8 : i32
    %153 = arith.muli %arg1, %c8_i32_89 : i32
    %c4_i32 = arith.constant 4 : i32
    %154 = arith.addi %153, %c4_i32 : i32
    %cst_90 = arith.constant 0.000000e+00 : f32
    %155 = vector.broadcast %cst_90 : f32 to vector<18x18xf32>
    %156 = arith.index_cast %154 : i32 to index
    %c0_91 = arith.constant 0 : index
    %157 = memref.load %arg3[%156, %c0_91] : memref<8x3xf32, #tpu.memory_space<smem>>
    %c0_92 = arith.constant 0 : index
    %c0_93 = arith.constant 0 : index
    %c0_94 = arith.constant 0 : index
    %158 = vector.load %arg6[%c0_92, %c0_93, %c0_94] : memref<3x18x18xf32, #tpu.memory_space<vmem>>, vector<1x18x18xf32>
    %159 = vector.shape_cast %158 : vector<1x18x18xf32> to vector<18x18xf32>
    %160 = vector.broadcast %157 : f32 to vector<18x18xf32>
    %161 = arith.mulf %160, %159 : vector<18x18xf32>
    %162 = arith.addf %155, %161 : vector<18x18xf32>
    %163 = arith.index_cast %154 : i32 to index
    %c1_95 = arith.constant 1 : index
    %164 = memref.load %arg3[%163, %c1_95] : memref<8x3xf32, #tpu.memory_space<smem>>
    %c1_96 = arith.constant 1 : index
    %c0_97 = arith.constant 0 : index
    %c0_98 = arith.constant 0 : index
    %165 = vector.load %arg6[%c1_96, %c0_97, %c0_98] : memref<3x18x18xf32, #tpu.memory_space<vmem>>, vector<1x18x18xf32>
    %166 = vector.shape_cast %165 : vector<1x18x18xf32> to vector<18x18xf32>
    %167 = vector.broadcast %164 : f32 to vector<18x18xf32>
    %168 = arith.mulf %167, %166 : vector<18x18xf32>
    %169 = arith.addf %162, %168 : vector<18x18xf32>
    %170 = arith.index_cast %154 : i32 to index
    %c2_99 = arith.constant 2 : index
    %171 = memref.load %arg3[%170, %c2_99] : memref<8x3xf32, #tpu.memory_space<smem>>
    %c2_100 = arith.constant 2 : index
    %c0_101 = arith.constant 0 : index
    %c0_102 = arith.constant 0 : index
    %172 = vector.load %arg6[%c2_100, %c0_101, %c0_102] : memref<3x18x18xf32, #tpu.memory_space<vmem>>, vector<1x18x18xf32>
    %173 = vector.shape_cast %172 : vector<1x18x18xf32> to vector<18x18xf32>
    %174 = vector.broadcast %171 : f32 to vector<18x18xf32>
    %175 = arith.mulf %174, %173 : vector<18x18xf32>
    %176 = arith.addf %169, %175 : vector<18x18xf32>
    %177 = arith.index_cast %154 : i32 to index
    %178 = memref.load %arg4[%177] : memref<8xf32, #tpu.memory_space<smem>>
    %179 = vector.broadcast %178 : f32 to vector<18x18xf32>
    %180 = arith.addf %176, %179 : vector<18x18xf32>
    %cst_103 = arith.constant 5.000000e-01 : f32
    %181 = vector.broadcast %cst_103 : f32 to vector<18x18xf32>
    %182 = arith.mulf %180, %181 : vector<18x18xf32>
    %cst_104 = arith.constant 0.000000e+00 : f32
    %183 = vector.broadcast %cst_104 : f32 to vector<18x18xf32>
    %184 = arith.cmpf one, %182, %183 : vector<18x18xf32>
    %cst_105 = arith.constant 0.000000e+00 : f32
    %185 = vector.broadcast %cst_105 : f32 to vector<18x18xf32>
    %186 = arith.select %184, %180, %185 : vector<18x18xi1>, vector<18x18xf32>
    %c0_106 = arith.constant 0 : index
    %c4 = arith.constant 4 : index
    %c0_107 = arith.constant 0 : index
    %c0_108 = arith.constant 0 : index
    %187 = vector.load %arg5[%c0_106, %c4, %c0_107, %c0_108] : memref<1x8x18x18xf32, #tpu.memory_space<vmem>>, vector<1x1x18x18xf32>
    %188 = vector.shape_cast %187 : vector<1x1x18x18xf32> to vector<18x18xf32>
    %189 = vector.shape_cast %186 : vector<18x18xf32> to vector<1x1x18x18xf32>
    tpu.vector_store %arg5[%c0_106, %c4, %c0_107, %c0_108], %189 {strides = array<i32>} : memref<1x8x18x18xf32, #tpu.memory_space<vmem>>, vector<1x1x18x18xf32>,
    %c8_i32_109 = arith.constant 8 : i32
    %190 = arith.muli %arg1, %c8_i32_109 : i32
    %c5_i32 = arith.constant 5 : i32
    %191 = arith.addi %190, %c5_i32 : i32
    %cst_110 = arith.constant 0.000000e+00 : f32
    %192 = vector.broadcast %cst_110 : f32 to vector<18x18xf32>
    %193 = arith.index_cast %191 : i32 to index
    %c0_111 = arith.constant 0 : index
    %194 = memref.load %arg3[%193, %c0_111] : memref<8x3xf32, #tpu.memory_space<smem>>
    %c0_112 = arith.constant 0 : index
    %c0_113 = arith.constant 0 : index
    %c0_114 = arith.constant 0 : index
    %195 = vector.load %arg6[%c0_112, %c0_113, %c0_114] : memref<3x18x18xf32, #tpu.memory_space<vmem>>, vector<1x18x18xf32>
    %196 = vector.shape_cast %195 : vector<1x18x18xf32> to vector<18x18xf32>
    %197 = vector.broadcast %194 : f32 to vector<18x18xf32>
    %198 = arith.mulf %197, %196 : vector<18x18xf32>
    %199 = arith.addf %192, %198 : vector<18x18xf32>
    %200 = arith.index_cast %191 : i32 to index
    %c1_115 = arith.constant 1 : index
    %201 = memref.load %arg3[%200, %c1_115] : memref<8x3xf32, #tpu.memory_space<smem>>
    %c1_116 = arith.constant 1 : index
    %c0_117 = arith.constant 0 : index
    %c0_118 = arith.constant 0 : index
    %202 = vector.load %arg6[%c1_116, %c0_117, %c0_118] : memref<3x18x18xf32, #tpu.memory_space<vmem>>, vector<1x18x18xf32>
    %203 = vector.shape_cast %202 : vector<1x18x18xf32> to vector<18x18xf32>
    %204 = vector.broadcast %201 : f32 to vector<18x18xf32>
    %205 = arith.mulf %204, %203 : vector<18x18xf32>
    %206 = arith.addf %199, %205 : vector<18x18xf32>
    %207 = arith.index_cast %191 : i32 to index
    %c2_119 = arith.constant 2 : index
    %208 = memref.load %arg3[%207, %c2_119] : memref<8x3xf32, #tpu.memory_space<smem>>
    %c2_120 = arith.constant 2 : index
    %c0_121 = arith.constant 0 : index
    %c0_122 = arith.constant 0 : index
    %209 = vector.load %arg6[%c2_120, %c0_121, %c0_122] : memref<3x18x18xf32, #tpu.memory_space<vmem>>, vector<1x18x18xf32>
    %210 = vector.shape_cast %209 : vector<1x18x18xf32> to vector<18x18xf32>
    %211 = vector.broadcast %208 : f32 to vector<18x18xf32>
    %212 = arith.mulf %211, %210 : vector<18x18xf32>
    %213 = arith.addf %206, %212 : vector<18x18xf32>
    %214 = arith.index_cast %191 : i32 to index
    %215 = memref.load %arg4[%214] : memref<8xf32, #tpu.memory_space<smem>>
    %216 = vector.broadcast %215 : f32 to vector<18x18xf32>
    %217 = arith.addf %213, %216 : vector<18x18xf32>
    %cst_123 = arith.constant 5.000000e-01 : f32
    %218 = vector.broadcast %cst_123 : f32 to vector<18x18xf32>
    %219 = arith.mulf %217, %218 : vector<18x18xf32>
    %cst_124 = arith.constant 0.000000e+00 : f32
    %220 = vector.broadcast %cst_124 : f32 to vector<18x18xf32>
    %221 = arith.cmpf one, %219, %220 : vector<18x18xf32>
    %cst_125 = arith.constant 0.000000e+00 : f32
    %222 = vector.broadcast %cst_125 : f32 to vector<18x18xf32>
    %223 = arith.select %221, %217, %222 : vector<18x18xi1>, vector<18x18xf32>
    %c0_126 = arith.constant 0 : index
    %c5 = arith.constant 5 : index
    %c0_127 = arith.constant 0 : index
    %c0_128 = arith.constant 0 : index
    %224 = vector.load %arg5[%c0_126, %c5, %c0_127, %c0_128] : memref<1x8x18x18xf32, #tpu.memory_space<vmem>>, vector<1x1x18x18xf32>
    %225 = vector.shape_cast %224 : vector<1x1x18x18xf32> to vector<18x18xf32>
    %226 = vector.shape_cast %223 : vector<18x18xf32> to vector<1x1x18x18xf32>
    tpu.vector_store %arg5[%c0_126, %c5, %c0_127, %c0_128], %226 {strides = array<i32>} : memref<1x8x18x18xf32, #tpu.memory_space<vmem>>, vector<1x1x18x18xf32>,
    %c8_i32_129 = arith.constant 8 : i32
    %227 = arith.muli %arg1, %c8_i32_129 : i32
    %c6_i32 = arith.constant 6 : i32
    %228 = arith.addi %227, %c6_i32 : i32
    %cst_130 = arith.constant 0.000000e+00 : f32
    %229 = vector.broadcast %cst_130 : f32 to vector<18x18xf32>
    %230 = arith.index_cast %228 : i32 to index
    %c0_131 = arith.constant 0 : index
    %231 = memref.load %arg3[%230, %c0_131] : memref<8x3xf32, #tpu.memory_space<smem>>
    %c0_132 = arith.constant 0 : index
    %c0_133 = arith.constant 0 : index
    %c0_134 = arith.constant 0 : index
    %232 = vector.load %arg6[%c0_132, %c0_133, %c0_134] : memref<3x18x18xf32, #tpu.memory_space<vmem>>, vector<1x18x18xf32>
    %233 = vector.shape_cast %232 : vector<1x18x18xf32> to vector<18x18xf32>
    %234 = vector.broadcast %231 : f32 to vector<18x18xf32>
    %235 = arith.mulf %234, %233 : vector<18x18xf32>
    %236 = arith.addf %229, %235 : vector<18x18xf32>
    %237 = arith.index_cast %228 : i32 to index
    %c1_135 = arith.constant 1 : index
    %238 = memref.load %arg3[%237, %c1_135] : memref<8x3xf32, #tpu.memory_space<smem>>
    %c1_136 = arith.constant 1 : index
    %c0_137 = arith.constant 0 : index
    %c0_138 = arith.constant 0 : index
    %239 = vector.load %arg6[%c1_136, %c0_137, %c0_138] : memref<3x18x18xf32, #tpu.memory_space<vmem>>, vector<1x18x18xf32>
    %240 = vector.shape_cast %239 : vector<1x18x18xf32> to vector<18x18xf32>
    %241 = vector.broadcast %238 : f32 to vector<18x18xf32>
    %242 = arith.mulf %241, %240 : vector<18x18xf32>
    %243 = arith.addf %236, %242 : vector<18x18xf32>
    %244 = arith.index_cast %228 : i32 to index
    %c2_139 = arith.constant 2 : index
    %245 = memref.load %arg3[%244, %c2_139] : memref<8x3xf32, #tpu.memory_space<smem>>
    %c2_140 = arith.constant 2 : index
    %c0_141 = arith.constant 0 : index
    %c0_142 = arith.constant 0 : index
    %246 = vector.load %arg6[%c2_140, %c0_141, %c0_142] : memref<3x18x18xf32, #tpu.memory_space<vmem>>, vector<1x18x18xf32>
    %247 = vector.shape_cast %246 : vector<1x18x18xf32> to vector<18x18xf32>
    %248 = vector.broadcast %245 : f32 to vector<18x18xf32>
    %249 = arith.mulf %248, %247 : vector<18x18xf32>
    %250 = arith.addf %243, %249 : vector<18x18xf32>
    %251 = arith.index_cast %228 : i32 to index
    %252 = memref.load %arg4[%251] : memref<8xf32, #tpu.memory_space<smem>>
    %253 = vector.broadcast %252 : f32 to vector<18x18xf32>
    %254 = arith.addf %250, %253 : vector<18x18xf32>
    %cst_143 = arith.constant 5.000000e-01 : f32
    %255 = vector.broadcast %cst_143 : f32 to vector<18x18xf32>
    %256 = arith.mulf %254, %255 : vector<18x18xf32>
    %cst_144 = arith.constant 0.000000e+00 : f32
    %257 = vector.broadcast %cst_144 : f32 to vector<18x18xf32>
    %258 = arith.cmpf one, %256, %257 : vector<18x18xf32>
    %cst_145 = arith.constant 0.000000e+00 : f32
    %259 = vector.broadcast %cst_145 : f32 to vector<18x18xf32>
    %260 = arith.select %258, %254, %259 : vector<18x18xi1>, vector<18x18xf32>
    %c0_146 = arith.constant 0 : index
    %c6 = arith.constant 6 : index
    %c0_147 = arith.constant 0 : index
    %c0_148 = arith.constant 0 : index
    %261 = vector.load %arg5[%c0_146, %c6, %c0_147, %c0_148] : memref<1x8x18x18xf32, #tpu.memory_space<vmem>>, vector<1x1x18x18xf32>
    %262 = vector.shape_cast %261 : vector<1x1x18x18xf32> to vector<18x18xf32>
    %263 = vector.shape_cast %260 : vector<18x18xf32> to vector<1x1x18x18xf32>
    tpu.vector_store %arg5[%c0_146, %c6, %c0_147, %c0_148], %263 {strides = array<i32>} : memref<1x8x18x18xf32, #tpu.memory_space<vmem>>, vector<1x1x18x18xf32>,
    %c8_i32_149 = arith.constant 8 : i32
    %264 = arith.muli %arg1, %c8_i32_149 : i32
    %c7_i32 = arith.constant 7 : i32
    %265 = arith.addi %264, %c7_i32 : i32
    %cst_150 = arith.constant 0.000000e+00 : f32
    %266 = vector.broadcast %cst_150 : f32 to vector<18x18xf32>
    %267 = arith.index_cast %265 : i32 to index
    %c0_151 = arith.constant 0 : index
    %268 = memref.load %arg3[%267, %c0_151] : memref<8x3xf32, #tpu.memory_space<smem>>
    %c0_152 = arith.constant 0 : index
    %c0_153 = arith.constant 0 : index
    %c0_154 = arith.constant 0 : index
    %269 = vector.load %arg6[%c0_152, %c0_153, %c0_154] : memref<3x18x18xf32, #tpu.memory_space<vmem>>, vector<1x18x18xf32>
    %270 = vector.shape_cast %269 : vector<1x18x18xf32> to vector<18x18xf32>
    %271 = vector.broadcast %268 : f32 to vector<18x18xf32>
    %272 = arith.mulf %271, %270 : vector<18x18xf32>
    %273 = arith.addf %266, %272 : vector<18x18xf32>
    %274 = arith.index_cast %265 : i32 to index
    %c1_155 = arith.constant 1 : index
    %275 = memref.load %arg3[%274, %c1_155] : memref<8x3xf32, #tpu.memory_space<smem>>
    %c1_156 = arith.constant 1 : index
    %c0_157 = arith.constant 0 : index
    %c0_158 = arith.constant 0 : index
    %276 = vector.load %arg6[%c1_156, %c0_157, %c0_158] : memref<3x18x18xf32, #tpu.memory_space<vmem>>, vector<1x18x18xf32>
    %277 = vector.shape_cast %276 : vector<1x18x18xf32> to vector<18x18xf32>
    %278 = vector.broadcast %275 : f32 to vector<18x18xf32>
    %279 = arith.mulf %278, %277 : vector<18x18xf32>
    %280 = arith.addf %273, %279 : vector<18x18xf32>
    %281 = arith.index_cast %265 : i32 to index
    %c2_159 = arith.constant 2 : index
    %282 = memref.load %arg3[%281, %c2_159] : memref<8x3xf32, #tpu.memory_space<smem>>
    %c2_160 = arith.constant 2 : index
    %c0_161 = arith.constant 0 : index
    %c0_162 = arith.constant 0 : index
    %283 = vector.load %arg6[%c2_160, %c0_161, %c0_162] : memref<3x18x18xf32, #tpu.memory_space<vmem>>, vector<1x18x18xf32>
    %284 = vector.shape_cast %283 : vector<1x18x18xf32> to vector<18x18xf32>
    %285 = vector.broadcast %282 : f32 to vector<18x18xf32>
    %286 = arith.mulf %285, %284 : vector<18x18xf32>
    %287 = arith.addf %280, %286 : vector<18x18xf32>
    %288 = arith.index_cast %265 : i32 to index
    %289 = memref.load %arg4[%288] : memref<8xf32, #tpu.memory_space<smem>>
    %290 = vector.broadcast %289 : f32 to vector<18x18xf32>
    %291 = arith.addf %287, %290 : vector<18x18xf32>
    %cst_163 = arith.constant 5.000000e-01 : f32
    %292 = vector.broadcast %cst_163 : f32 to vector<18x18xf32>
    %293 = arith.mulf %291, %292 : vector<18x18xf32>
    %cst_164 = arith.constant 0.000000e+00 : f32
    %294 = vector.broadcast %cst_164 : f32 to vector<18x18xf32>
    %295 = arith.cmpf one, %293, %294 : vector<18x18xf32>
    %cst_165 = arith.constant 0.000000e+00 : f32
    %296 = vector.broadcast %cst_165 : f32 to vector<18x18xf32>
    %297 = arith.select %295, %291, %296 : vector<18x18xi1>, vector<18x18xf32>
    %c0_166 = arith.constant 0 : index
    %c7 = arith.constant 7 : index
    %c0_167 = arith.constant 0 : index
    %c0_168 = arith.constant 0 : index
    %298 = vector.load %arg5[%c0_166, %c7, %c0_167, %c0_168] : memref<1x8x18x18xf32, #tpu.memory_space<vmem>>, vector<1x1x18x18xf32>
    %299 = vector.shape_cast %298 : vector<1x1x18x18xf32> to vector<18x18xf32>
    %300 = vector.shape_cast %297 : vector<18x18xf32> to vector<1x1x18x18xf32>
    tpu.vector_store %arg5[%c0_166, %c7, %c0_167, %c0_168], %300 {strides = array<i32>} : memref<1x8x18x18xf32, #tpu.memory_space<vmem>>, vector<1x1x18x18xf32>,
    return
  }
  func.func @transform_0(%arg0: i32, %arg1: i32) -> (i32, i32, i32, i32) {
    %c0_i32 = arith.constant 0 : i32
    %c0_i32_0 = arith.constant 0 : i32
    %c0_i32_1 = arith.constant 0 : i32
    %c0_i32_2 = arith.constant 0 : i32
    return %arg0, %c0_i32, %c0_i32_0, %c0_i32_1 : i32, i32, i32, i32
  }
  func.func @transform_1(%arg0: i32, %arg1: i32) -> (i32, i32) {
    %c0_i32 = arith.constant 0 : i32
    %c0_i32_0 = arith.constant 0 : i32
    %c0_i32_1 = arith.constant 0 : i32
    return %c0_i32, %c0_i32_0 : i32, i32
  }
  func.func @transform_2(%arg0: i32, %arg1: i32) -> i32 {
    %c0_i32 = arith.constant 0 : i32
    %c0_i32_0 = arith.constant 0 : i32
    return %c0_i32 : i32
  }
  func.func @transform_3(%arg0: i32, %arg1: i32) -> (i32, i32, i32, i32) {
    %c0_i32 = arith.constant 0 : i32
    %c0_i32_0 = arith.constant 0 : i32
    %c0_i32_1 = arith.constant 0 : i32
    return %arg0, %arg1, %c0_i32, %c0_i32_0 : i32, i32, i32, i32
  }
}

</mosaic_0001>

<llo_original>
// kernel: tpu_custom_call.1
$region0: #{tpu_custom_call.1}
  #allocation0 [shape = 'u32[]', space=smem, size = 0x4, offset = 0x4, fixed_abs, tag = 'smem constant byte address 0x4 - core index']
  #allocation1 [shape = 'u32[144,128]{1,0:T(1,128)}', space=vmem, size = 0x12000, scoped, tag = 'internal scratch']
  #allocation2 [shape = 'f32[3,18,18]{2,1,0:T(8,128)}', space=vmem, size = 0x9000, scoped, tag = 'scratch operand']
  %s0 = inlined_call_operand.hbm [shape: f32[2,3,16,16], index: 0, kind: input, shape index: {}]
  %s1 = inlined_call_operand.vmem [shape: f32[8,3], index: 1, kind: input, shape index: {}]
  %s2 = inlined_call_operand.vmem [shape: f32[8], index: 2, kind: input, shape index: {}]
  %s3 = inlined_call_operand.vmem [shape: f32[2,8,18,18], index: 3, kind: output, shape index: {}]
  %s4 = sld [smem:[#allocation0]]
  $region57: #{tpu_custom_call.1} parent=0
    _
  %s6 = ssub.s32 1, %s4
  %s7 = scalar_select 0, %s6, %s4
  $region1: #{tpu_custom_call.1} parent=0
    #allocation3 [shape = 'u8[49152]{0}', space=vmem, size = 0xc000, scoped, tag = 'input window, operand 0']
    #allocation4 [shape = 's32[2]{0}', space=sflag, size = 0x8, scoped, tag = 'scoped memory for tpu_custom_call.1']
    #allocation5 [shape = 's32[2]{0}', space=sflag, size = 0x8, scoped, tag = 'scoped memory for tpu_custom_call.1']
    #allocation6 [shape = 'u8[4096]{0}', space=smem, size = 0x1000, scoped, tag = 'input window, operand 1, single buffered']
    #allocation7 [shape = 'u8[512]{0}', space=smem, size = 0x200, scoped, tag = 'input window, operand 2, single buffered']
    #allocation8 [shape = 's32[1]{0}', space=sflag, size = 0x4, scoped, tag = 'scoped memory for tpu_custom_call.1']
    %8 = vsyncpa [#allocation4], 0
    %s9 = scalar_lea.sflag [#allocation4], 1
    %10 = vsyncpa %s9, 0
    %11 = vsyncpa [#allocation5], 0
    %12 = vsyncpa [#allocation8], 0
    loop: start=0, step=1, limit=4
    $region2: #{tpu_custom_call.1} parent=1 // loop_pre_header
      _
    $region3: #{tpu_custom_call.1} parent=1 // loop_header
      %s14 = sphi 0, %s18
      %p15 = scmp.ge.s32.totalorder %s14, 4
      %s21 = sphi 0, %s33
      %s22 = sphi 0, %s29
      %s23 = sphi 0, %s21
      %s24 = sphi 0, %s22
      %s25 = sphi 0, %s23
      %s26 = sphi 0, %s24
      %s36 = sphi 0, %s38
      %s39 = sphi 0, %s36
      %s40 = sphi 0, %s39
      %s56 = sphi 0, %s40
      %s60 = sphi 0, %s60
      %s62 = sphi 0, %s60
      %s63 = sphi 0, %s62
      %s77 = sphi 0, %s63
      %s81 = sphi 0, %s81
      %s83 = sphi 0, %s81
      %s84 = sphi 0, %s83
      %s98 = sphi 0, %s84
      %s106 = sphi 0, %s108
      %s109 = sphi 0, %s106
      %s110 = sphi 0, %s109
      %s126 = sphi 0, %s110
    $region4: #{tpu_custom_call.1} parent=1 // loop_header_branch
      %17 = sbr.rel (%p15) target = $region8
    $region5: #{tpu_custom_call.1} parent=1 // loop_body
      %s19 = ssub.s32 %s14, 1
      %s20 = ssub.s32 %s14, 2
      %s27 = sadd.s32 1, %s22
      %p28 = scmp.ge.s32.totalorder %s27, 1
      %s29 = scalar_select %p28, 0, %s27
      %s30 = sadd.s32 1, %s21
      %s31 = scalar_select %p28, %s30, %s21
      %p32 = scmp.ge.s32.totalorder %s31, 2
      %s33 = scalar_select %p32, 0, %s31
      %s34 = ssub.s32 %s21, %s33
      %p35 = scmp.eq.s32.totalorder %s34, 0
      %s37 = sadd.s32 %s36, 1
      %s38 = scalar_select %p35, %s36, %s37
      %p41 = pneg %p35
      %p42 = scmp.eq.s32.totalorder %s14, 1
      %p43 = por %p41, %p42
      %p44 = scmp.ne.s32.totalorder %s36, %s39
      %p45 = scmp.eq.s32.totalorder %s14, 0
      %p46 = por %p44, %p45
      %p47 = scmp.ne.s32.totalorder %s36, %s39
      %p48 = scmp.eq.s32.totalorder %s19, 1
      %p49 = por %p47, %p48
      %p50 = scmp.ne.s32.totalorder %s39, %s40
      %p51 = scmp.eq.s32.totalorder %s19, 0
      %p52 = por %p50, %p51
      %p53 = scmp.ne.s32.totalorder %s39, %s40
      %p54 = scmp.eq.s32.totalorder %s20, 1
      %p55 = por %p53, %p54
      %p57 = scmp.ne.s32.totalorder %s40, %s56
      %p58 = scmp.eq.s32.totalorder %s20, 0
      %p59 = por %p57, %p58
      %s61 = sadd.s32 %s60, 1
      %p64 = scmp.eq.s32.totalorder %s14, 1
      %p65 = scmp.ne.s32.totalorder %s60, %s62
      %p66 = scmp.eq.s32.totalorder %s14, 0
      %p67 = por %p65, %p66
      %p68 = scmp.ne.s32.totalorder %s60, %s62
      %p69 = scmp.eq.s32.totalorder %s19, 1
      %p70 = por %p68, %p69
      %p71 = scmp.ne.s32.totalorder %s62, %s63
      %p72 = scmp.eq.s32.totalorder %s19, 0
      %p73 = por %p71, %p72
      %p74 = scmp.ne.s32.totalorder %s62, %s63
      %p75 = scmp.eq.s32.totalorder %s20, 1
      %p76 = por %p74, %p75
      %p78 = scmp.ne.s32.totalorder %s63, %s77
      %p79 = scmp.eq.s32.totalorder %s20, 0
      %p80 = por %p78, %p79
      %s82 = sadd.s32 %s81, 1
      %p85 = scmp.eq.s32.totalorder %s14, 1
      %p86 = scmp.ne.s32.totalorder %s81, %s83
      %p87 = scmp.eq.s32.totalorder %s14, 0
      %p88 = por %p86, %p87
      %p89 = scmp.ne.s32.totalorder %s81, %s83
      %p90 = scmp.eq.s32.totalorder %s19, 1
      %p91 = por %p89, %p90
      %p92 = scmp.ne.s32.totalorder %s83, %s84
      %p93 = scmp.eq.s32.totalorder %s19, 0
      %p94 = por %p92, %p93
      %p95 = scmp.ne.s32.totalorder %s83, %s84
      %p96 = scmp.eq.s32.totalorder %s20, 1
      %p97 = por %p95, %p96
      %p99 = scmp.ne.s32.totalorder %s84, %s98
      %p100 = scmp.eq.s32.totalorder %s20, 0
      %p101 = por %p99, %p100
      %s102 = ssub.s32 %s21, %s33
      %s103 = ssub.s32 %s22, %s29
      %s104 = sor.u32 %s102, %s103
      %p105 = scmp.eq.s32.totalorder %s104, 0
      %s107 = sadd.s32 %s106, 1
      %s108 = scalar_select %p105, %s106, %s107
      %p111 = pneg %p105
      %p112 = scmp.eq.s32.totalorder %s14, 1
      %p113 = por %p111, %p112
      %p114 = scmp.ne.s32.totalorder %s106, %s109
      %p115 = scmp.eq.s32.totalorder %s14, 0
      %p116 = por %p114, %p115
      %p117 = scmp.ne.s32.totalorder %s106, %s109
      %p118 = scmp.eq.s32.totalorder %s19, 1
      %p119 = por %p117, %p118
      %p120 = scmp.ne.s32.totalorder %s109, %s110
      %p121 = scmp.eq.s32.totalorder %s19, 0
      %p122 = por %p120, %p121
      %p123 = scmp.ne.s32.totalorder %s109, %s110
      %p124 = scmp.eq.s32.totalorder %s20, 1
      %p125 = por %p123, %p124
      %p127 = scmp.ne.s32.totalorder %s110, %s126
      %p128 = scmp.eq.s32.totalorder %s20, 0
      %p129 = por %p127, %p128
      %p130 = scmp.le.s32.totalorder 1, %s14
      %p131 = scmp.lt.s32.totalorder %s14, 3
      %p132 = pnand %p130, %p131
      %p133 = pneg %p132
      // Predicated region
      $region9: #{tpu_custom_call.1} parent=5 // pred_check
        _
      $region10: #{tpu_custom_call.1} parent=5 // pred_check_branch
        %135 = sbr.rel (%p132) target = $region12
      $region11: #{tpu_custom_call.1} parent=5 // pred_region
        %s136 = ssub.s32 %s14, 1
        // Predicated region
        $region13: #{tpu_custom_call.1} parent=11 // pred_check
          %p137 = pneg %p73
        $region14: #{tpu_custom_call.1} parent=11 // pred_check_branch
          %139 = sbr.rel (%p137) target = $region16
        $region15: #{tpu_custom_call.1} parent=11 // pred_region
          %s141 = ssub.s32 128, 128
          %142 = vsyncadd [#allocation5], %s141
          %s144 = sshll.u32 %s1, 4
          %s145 = int_to_ptr.vmem [resolvable:$true] %s144
          %147 = dma.vmem_to_smem %s145, 128, [#allocation6], [#allocation5]
        $region16: #{tpu_custom_call.1} parent=11 // pred_fallthru
          _
        // Predicated region
        $region17: #{tpu_custom_call.1} parent=11 // pred_check
          %p148 = pneg %p94
        $region18: #{tpu_custom_call.1} parent=11 // pred_check_branch
          %150 = sbr.rel (%p148) target = $region20
        $region19: #{tpu_custom_call.1} parent=11 // pred_region
          %s152 = ssub.s32 16, 16
          %153 = vsyncadd [#allocation8], %s152
          %s155 = sshll.u32 %s2, 4
          %s156 = int_to_ptr.vmem [resolvable:$true] %s155
          %158 = dma.vmem_to_smem %s156, 16, [#allocation7], [#allocation8]
        $region20: #{tpu_custom_call.1} parent=11 // pred_fallthru
          _
      $region12: #{tpu_custom_call.1} parent=5 // pred_fallthru
        _
      %p159 = scmp.lt.s32.totalorder %s14, 2
      // Predicated region
      $region21: #{tpu_custom_call.1} parent=5 // pred_check
        %p160 = pneg %p159
      $region22: #{tpu_custom_call.1} parent=5 // pred_check_branch
        %162 = sbr.rel (%p160) target = $region24
      $region23: #{tpu_custom_call.1} parent=5 // pred_region
        // Predicated region
        $region25: #{tpu_custom_call.1} parent=23 // pred_check
          %p163 = pneg %p46
        $region26: #{tpu_custom_call.1} parent=23 // pred_check_branch
          %165 = sbr.rel (%p163) target = $region28
        $region27: #{tpu_custom_call.1} parent=23 // pred_region
          %s166 = sand.u32 %s36, 1
          %s167 = scalar_lea.sflag [#allocation4], %s166
          %s168 = sand.u32 %s36, 1
          %s169 = smul.addr %s168, 48
          %s170 = scalar_lea.vmem [#allocation3], %s169
          %s172 = ssub.s32 768, 768
          %173 = vsyncadd %s167, %s172
          %s174 = smul.addr %s21, 6
          %s175 = smul.addr %s174, 128
          %s176 = scalar_lea.hbm %s0, %s175
          %s177 = sshll.u32 %s170, 4
          %s178 = int_to_ptr.vmem [resolvable:$true] %s177
          %183 = dma.hbm_to_vmem [thread:$0]  %s176, 768, %s178, %s167, 128, 128, 8
        $region28: #{tpu_custom_call.1} parent=23 // pred_fallthru
          _
      $region24: #{tpu_custom_call.1} parent=5 // pred_fallthru
        _
      %p184 = scmp.le.s32.totalorder 1, %s14
      %p185 = scmp.lt.s32.totalorder %s14, 3
      %p186 = pnand %p184, %p185
      %p187 = pneg %p186
      // Predicated region
      $region29: #{tpu_custom_call.1} parent=5 // pred_check
        _
      $region30: #{tpu_custom_call.1} parent=5 // pred_check_branch
        %189 = sbr.rel (%p186) target = $region32
      $region31: #{tpu_custom_call.1} parent=5 // pred_region
        %s190 = ssub.s32 %s14, 1
        %s191 = sand.u32 %s39, 1
        %s192 = scalar_lea.sflag [#allocation4], %s191
        %s193 = sand.u32 %s39, 1
        %s194 = smul.addr %s193, 48
        %s195 = scalar_lea.vmem [#allocation3], %s194
        // Predicated region
        $region33: #{tpu_custom_call.1} parent=31 // pred_check
          %p196 = pneg %p52
        $region34: #{tpu_custom_call.1} parent=31 // pred_check_branch
          %198 = sbr.rel (%p196) target = $region36
        $region35: #{tpu_custom_call.1} parent=31 // pred_region
          %199 = dma.done %s192, 768
        $region36: #{tpu_custom_call.1} parent=31 // pred_fallthru
          _
        // Predicated region
        $region37: #{tpu_custom_call.1} parent=31 // pred_check
          %p200 = pneg %p73
        $region38: #{tpu_custom_call.1} parent=31 // pred_check_branch
          %202 = sbr.rel (%p200) target = $region40
        $region39: #{tpu_custom_call.1} parent=31 // pred_region
          %203 = dma.done [#allocation5], 128
        $region40: #{tpu_custom_call.1} parent=31 // pred_fallthru
          _
        // Predicated region
        $region41: #{tpu_custom_call.1} parent=31 // pred_check
          %p204 = pneg %p94
        $region42: #{tpu_custom_call.1} parent=31 // pred_check_branch
          %206 = sbr.rel (%p204) target = $region44
        $region43: #{tpu_custom_call.1} parent=31 // pred_region
          %207 = dma.done [#allocation8], 16
        $region44: #{tpu_custom_call.1} parent=31 // pred_fallthru
          _
        %208 = sfence
        %s209 = sand.u32 %s39, 1
        %s210 = scalar_lea.sflag [#allocation4], %s209
        %s211 = sand.u32 %s39, 1
        %s212 = smul.addr %s211, 48
        %s213 = scalar_lea.vmem [#allocation3], %s212
        %p214 = pneg %p52
        %p215 = pneg %p49
        %p216 = pneg %p73
        %p217 = pneg %p70
        %p218 = pneg %p94
        %p219 = pneg %p91
        %p220 = pneg %p122
        %p221 = pneg %p119
        %s222 = smul.u32 8, %s24
        %p223 = scmp.lt.s32.totalorder %s23, 1
        %s224 = scalar_select %p223, %s23, 1
        %p225 = scmp.lt.s32.totalorder %s222, 7
        %s226 = scalar_select %p225, %s222, 7
        %s227 = smul.addr %s226, 3
        %s228 = smul.addr %s224, 24
        %s229 = sadd.s32 %s227, %s228
        %s230 = smul.addr %s229, 8
        %s231 = scalar_lea.vmem %s3, %s230
        %s232 = smul.u32 8, %s24
        %p233 = scmp.lt.s32.totalorder %s23, 1
        %s234 = scalar_select %p233, %s23, 1
        %p235 = scmp.lt.s32.totalorder %s232, 7
        %s236 = scalar_select %p235, %s232, 7
        %s237 = smul.addr %s236, 3
        %s238 = smul.addr %s234, 24
        %s239 = sadd.s32 %s237, %s238
        %s240 = smul.addr %s239, 8
        %s241 = scalar_lea.vmem %s3, %s240
        %s242 = smul.u32 8, %s24
        %vm243 = vcmask 146432
        %244 = vst.msk [vmem:[#allocation2] sm:$0xff] %vm243, 0.0
        %245 = vst.msk [vmem:[#allocation2 + $0x8] sm:$0xff] %vm243, 0.0
        %vm246 = vcmask 140288
        %247 = vst.msk [vmem:[#allocation2 + $0x10] sm:$0x3] %vm246, 0.0
        %248 = vst.msk [vmem:[#allocation2 + $0x18] sm:$0xff] %vm243, 0.0
        %249 = vst.msk [vmem:[#allocation2 + $0x20] sm:$0xff] %vm243, 0.0
        %250 = vst.msk [vmem:[#allocation2 + $0x28] sm:$0x3] %vm246, 0.0
        %251 = vst.msk [vmem:[#allocation2 + $0x30] sm:$0xff] %vm243, 0.0
        %252 = vst.msk [vmem:[#allocation2 + $0x38] sm:$0xff] %vm243, 0.0
        %253 = vst.msk [vmem:[#allocation2 + $0x40] sm:$0x3] %vm246, 0.0
        %v254 = vld [vmem:[%s195] sm:$0xff]
        %v255 = vld [vmem:[%s195 + $0x8] sm:$0xff]
        %v256 = vld [vmem:[%s195 + $0x10] sm:$0xff]
        %v257 = vld [vmem:[%s195 + $0x18] sm:$0xff]
        %v258 = vld [vmem:[%s195 + $0x20] sm:$0xff]
        %v259 = vld [vmem:[%s195 + $0x28] sm:$0xff]
        %266 = vrot.lane.b32.xlu0 %v254, 1
        %v267 = vpop.permute.xlu0 %266
        %268 = vrot.lane.b32.xlu0 %v255, 1
        %v269 = vpop.permute.xlu0 %268
        %270 = vrot.lane.b32.xlu0 %v256, 1
        %v271 = vpop.permute.xlu0 %270
        %272 = vrot.lane.b32.xlu0 %v257, 1
        %v273 = vpop.permute.xlu0 %272
        %274 = vrot.lane.b32.xlu0 %v258, 1
        %v275 = vpop.permute.xlu0 %274
        %276 = vrot.lane.b32.xlu0 %v259, 1
        %v277 = vpop.permute.xlu0 %276
        %vm284 = vcmask 138248
        %285 = vst.msk [vmem:[#allocation2 + $0x1] sm:$0xff] %vm284, %v267
        %286 = vst.msk [vmem:[#allocation2 + $0x9] sm:$0xff] %vm284, %v269
        %287 = vst.msk [vmem:[#allocation2 + $0x19] sm:$0xff] %vm284, %v271
        %288 = vst.msk [vmem:[#allocation2 + $0x21] sm:$0xff] %vm284, %v273
        %289 = vst.msk [vmem:[#allocation2 + $0x31] sm:$0xff] %vm284, %v275
        %290 = vst.msk [vmem:[#allocation2 + $0x39] sm:$0xff] %vm284, %v277
        %s291 = smul.u32 %s24, 8
        %s292 = smul.u32 %s291, 128
        %s293 = sld [smem:[#allocation6 + %s292]]
        %v294 = vld [vmem:[#allocation2] sm:$0xff]
        %v295 = vld [vmem:[#allocation2 + $0x8] sm:$0xff]
        %v296 = vld [vmem:[#allocation2 + $0x10] sm:$0x3]
        %v297 = vstv %s293
        %v298 = vmul.f32 %v297, %v294
        %v299 = vmul.f32 %v297, %v295
        %v300 = vmul.f32 %v297, %v296
        %v301 = vadd.f32 %v298, 0.0
        %v302 = vadd.f32 %v299, 0.0
        %v303 = vadd.f32 %v300, 0.0
        %s304 = sadd.s32 %s292, 1
        %s305 = sld [smem:[#allocation6 + %s304]]
        %s306 = scalar_lea.vmem [#allocation2], 24
        %v307 = vld [vmem:[%s306] sm:$0xff]
        %v308 = vld [vmem:[%s306 + $0x8] sm:$0xff]
        %v309 = vld [vmem:[%s306 + $0x10] sm:$0x3]
        %v310 = vstv %s305
        %v311 = vmul.f32 %v310, %v307
        %v312 = vmul.f32 %v310, %v308
        %v313 = vmul.f32 %v310, %v309
        %v314 = vadd.f32 %v301, %v311
        %v315 = vadd.f32 %v302, %v312
        %v316 = vadd.f32 %v303, %v313
        %s317 = sadd.s32 %s292, 2
        %s318 = sld [smem:[#allocation6 + %s317]]
        %s319 = scalar_lea.vmem [#allocation2], 48
        %v320 = vld [vmem:[%s319] sm:$0xff]
        %v321 = vld [vmem:[%s319 + $0x8] sm:$0xff]
        %v322 = vld [vmem:[%s319 + $0x10] sm:$0x3]
        %v323 = vstv %s318
        %v324 = vmul.f32 %v323, %v320
        %v325 = vmul.f32 %v323, %v321
        %v326 = vmul.f32 %v323, %v322
        %v327 = vadd.f32 %v314, %v324
        %v328 = vadd.f32 %v315, %v325
        %v329 = vadd.f32 %v316, %v326
        %s330 = sld [smem:[#allocation7 + %s291]]
        %v331 = vstv %s330
        %v332 = vadd.f32 %v327, %v331
        %v333 = vadd.f32 %v328, %v331
        %v334 = vadd.f32 %v329, %v331
        %v335 = vmul.f32 %v332, 0.5
        %v336 = vmul.f32 %v333, 0.5
        %v337 = vmul.f32 %v334, 0.5
        %vm338 = vcmp.ne.f32.partialorder %v335, 0.0
        %vm339 = vcmp.ne.f32.partialorder %v336, 0.0
        %vm340 = vcmp.ne.f32.partialorder %v337, 0.0
        %v341 = vsel %vm338, %v332, 0.0
        %v342 = vsel %vm339, %v333, 0.0
        %v343 = vsel %vm340, %v334, 0.0
        %344 = vst.msk [vmem:[%s241] sm:$0xff] %vm243, %v341
        %345 = vst.msk [vmem:[%s241 + $0x8] sm:$0xff] %vm243, %v342
        %346 = vst.msk [vmem:[%s241 + $0x10] sm:$0x3] %vm246, %v343
        %s347 = sadd.s32 %s291, 1
        %s348 = smul.u32 %s347, 128
        %s349 = sld [smem:[#allocation6 + %s348]]
        %v350 = vld [vmem:[#allocation2] sm:$0xff]
        %v351 = vld [vmem:[#allocation2 + $0x8] sm:$0xff]
        %v352 = vld [vmem:[#allocation2 + $0x10] sm:$0x3]
        %v353 = vstv %s349
        %v354 = vmul.f32 %v353, %v350
        %v355 = vmul.f32 %v353, %v351
        %v356 = vmul.f32 %v353, %v352
        %v357 = vadd.f32 %v354, 0.0
        %v358 = vadd.f32 %v355, 0.0
        %v359 = vadd.f32 %v356, 0.0
        %s360 = sadd.s32 %s348, 1
        %s361 = sld [smem:[#allocation6 + %s360]]
        %v362 = vld [vmem:[%s306] sm:$0xff]
        %v363 = vld [vmem:[%s306 + $0x8] sm:$0xff]
        %v364 = vld [vmem:[%s306 + $0x10] sm:$0x3]
        %v365 = vstv %s361
        %v366 = vmul.f32 %v365, %v362
        %v367 = vmul.f32 %v365, %v363
        %v368 = vmul.f32 %v365, %v364
        %v369 = vadd.f32 %v357, %v366
        %v370 = vadd.f32 %v358, %v367
        %v371 = vadd.f32 %v359, %v368
        %s372 = sadd.s32 %s348, 2
        %s373 = sld [smem:[#allocation6 + %s372]]
        %v374 = vld [vmem:[%s319] sm:$0xff]
        %v375 = vld [vmem:[%s319 + $0x8] sm:$0xff]
        %v376 = vld [vmem:[%s319 + $0x10] sm:$0x3]
        %v377 = vstv %s373
        %v378 = vmul.f32 %v377, %v374
        %v379 = vmul.f32 %v377, %v375
        %v380 = vmul.f32 %v377, %v376
        %v381 = vadd.f32 %v369, %v378
        %v382 = vadd.f32 %v370, %v379
        %v383 = vadd.f32 %v371, %v380
        %s384 = sld [smem:[#allocation7 + %s347]]
        %v385 = vstv %s384
        %v386 = vadd.f32 %v381, %v385
        %v387 = vadd.f32 %v382, %v385
        %v388 = vadd.f32 %v383, %v385
        %v389 = vmul.f32 %v386, 0.5
        %v390 = vmul.f32 %v387, 0.5
        %v391 = vmul.f32 %v388, 0.5
        %vm392 = vcmp.ne.f32.partialorder %v389, 0.0
        %vm393 = vcmp.ne.f32.partialorder %v390, 0.0
        %vm394 = vcmp.ne.f32.partialorder %v391, 0.0
        %v395 = vsel %vm392, %v386, 0.0
        %v396 = vsel %vm393, %v387, 0.0
        %v397 = vsel %vm394, %v388, 0.0
        %s398 = scalar_lea.vmem %s241, 24
        %399 = vst.msk [vmem:[%s398] sm:$0xff] %vm243, %v395
        %400 = vst.msk [vmem:[%s398 + $0x8] sm:$0xff] %vm243, %v396
        %401 = vst.msk [vmem:[%s398 + $0x10] sm:$0x3] %vm246, %v397
        %s402 = sadd.s32 %s291, 2
        %s403 = smul.u32 %s402, 128
        %s404 = sld [smem:[#allocation6 + %s403]]
        %v405 = vld [vmem:[#allocation2] sm:$0xff]
        %v406 = vld [vmem:[#allocation2 + $0x8] sm:$0xff]
        %v407 = vld [vmem:[#allocation2 + $0x10] sm:$0x3]
        %v408 = vstv %s404
        %v409 = vmul.f32 %v408, %v405
        %v410 = vmul.f32 %v408, %v406
        %v411 = vmul.f32 %v408, %v407
        %v412 = vadd.f32 %v409, 0.0
        %v413 = vadd.f32 %v410, 0.0
        %v414 = vadd.f32 %v411, 0.0
        %s415 = sadd.s32 %s403, 1
        %s416 = sld [smem:[#allocation6 + %s415]]
        %v417 = vld [vmem:[%s306] sm:$0xff]
        %v418 = vld [vmem:[%s306 + $0x8] sm:$0xff]
        %v419 = vld [vmem:[%s306 + $0x10] sm:$0x3]
        %v420 = vstv %s416
        %v421 = vmul.f32 %v420, %v417
        %v422 = vmul.f32 %v420, %v418
        %v423 = vmul.f32 %v420, %v419
        %v424 = vadd.f32 %v412, %v421
        %v425 = vadd.f32 %v413, %v422
        %v426 = vadd.f32 %v414, %v423
        %s427 = sadd.s32 %s403, 2
        %s428 = sld [smem:[#allocation6 + %s427]]
        %v429 = vld [vmem:[%s319] sm:$0xff]
        %v430 = vld [vmem:[%s319 + $0x8] sm:$0xff]
        %v431 = vld [vmem:[%s319 + $0x10] sm:$0x3]
        %v432 = vstv %s428
        %v433 = vmul.f32 %v432, %v429
        %v434 = vmul.f32 %v432, %v430
        %v435 = vmul.f32 %v432, %v431
        %v436 = vadd.f32 %v424, %v433
        %v437 = vadd.f32 %v425, %v434
        %v438 = vadd.f32 %v426, %v435
        %s439 = sld [smem:[#allocation7 + %s402]]
        %v440 = vstv %s439
        %v441 = vadd.f32 %v436, %v440
        %v442 = vadd.f32 %v437, %v440
        %v443 = vadd.f32 %v438, %v440
        %v444 = vmul.f32 %v441, 0.5
        %v445 = vmul.f32 %v442, 0.5
        %v446 = vmul.f32 %v443, 0.5
        %vm447 = vcmp.ne.f32.partialorder %v444, 0.0
        %vm448 = vcmp.ne.f32.partialorder %v445, 0.0
        %vm449 = vcmp.ne.f32.partialorder %v446, 0.0
        %v450 = vsel %vm447, %v441, 0.0
        %v451 = vsel %vm448, %v442, 0.0
        %v452 = vsel %vm449, %v443, 0.0
        %s453 = scalar_lea.vmem %s241, 48
        %454 = vst.msk [vmem:[%s453] sm:$0xff] %vm243, %v450
        %455 = vst.msk [vmem:[%s453 + $0x8] sm:$0xff] %vm243, %v451
        %456 = vst.msk [vmem:[%s453 + $0x10] sm:$0x3] %vm246, %v452
        %s457 = sadd.s32 %s291, 3
        %s458 = smul.u32 %s457, 128
        %s459 = sld [smem:[#allocation6 + %s458]]
        %v460 = vld [vmem:[#allocation2] sm:$0xff]
        %v461 = vld [vmem:[#allocation2 + $0x8] sm:$0xff]
        %v462 = vld [vmem:[#allocation2 + $0x10] sm:$0x3]
        %v463 = vstv %s459
        %v464 = vmul.f32 %v463, %v460
        %v465 = vmul.f32 %v463, %v461
        %v466 = vmul.f32 %v463, %v462
        %v467 = vadd.f32 %v464, 0.0
        %v468 = vadd.f32 %v465, 0.0
        %v469 = vadd.f32 %v466, 0.0
        %s470 = sadd.s32 %s458, 1
        %s471 = sld [smem:[#allocation6 + %s470]]
        %v472 = vld [vmem:[%s306] sm:$0xff]
        %v473 = vld [vmem:[%s306 + $0x8] sm:$0xff]
        %v474 = vld [vmem:[%s306 + $0x10] sm:$0x3]
        %v475 = vstv %s471
        %v476 = vmul.f32 %v475, %v472
        %v477 = vmul.f32 %v475, %v473
        %v478 = vmul.f32 %v475, %v474
        %v479 = vadd.f32 %v467, %v476
        %v480 = vadd.f32 %v468, %v477
        %v481 = vadd.f32 %v469, %v478
        %s482 = sadd.s32 %s458, 2
        %s483 = sld [smem:[#allocation6 + %s482]]
        %v484 = vld [vmem:[%s319] sm:$0xff]
        %v485 = vld [vmem:[%s319 + $0x8] sm:$0xff]
        %v486 = vld [vmem:[%s319 + $0x10] sm:$0x3]
        %v487 = vstv %s483
        %v488 = vmul.f32 %v487, %v484
        %v489 = vmul.f32 %v487, %v485
        %v490 = vmul.f32 %v487, %v486
        %v491 = vadd.f32 %v479, %v488
        %v492 = vadd.f32 %v480, %v489
        %v493 = vadd.f32 %v481, %v490
        %s494 = sld [smem:[#allocation7 + %s457]]
        %v495 = vstv %s494
        %v496 = vadd.f32 %v491, %v495
        %v497 = vadd.f32 %v492, %v495
        %v498 = vadd.f32 %v493, %v495
        %v499 = vmul.f32 %v496, 0.5
        %v500 = vmul.f32 %v497, 0.5
        %v501 = vmul.f32 %v498, 0.5
        %vm502 = vcmp.ne.f32.partialorder %v499, 0.0
        %vm503 = vcmp.ne.f32.partialorder %v500, 0.0
        %vm504 = vcmp.ne.f32.partialorder %v501, 0.0
        %v505 = vsel %vm502, %v496, 0.0
        %v506 = vsel %vm503, %v497, 0.0
        %v507 = vsel %vm504, %v498, 0.0
        %s508 = scalar_lea.vmem %s241, 72
        %509 = vst.msk [vmem:[%s508] sm:$0xff] %vm243, %v505
        %510 = vst.msk [vmem:[%s508 + $0x8] sm:$0xff] %vm243, %v506
        %511 = vst.msk [vmem:[%s508 + $0x10] sm:$0x3] %vm246, %v507
        %s512 = sadd.s32 %s291, 4
        %s513 = smul.u32 %s512, 128
        %s514 = sld [smem:[#allocation6 + %s513]]
        %v515 = vld [vmem:[#allocation2] sm:$0xff]
        %v516 = vld [vmem:[#allocation2 + $0x8] sm:$0xff]
        %v517 = vld [vmem:[#allocation2 + $0x10] sm:$0x3]
        %v518 = vstv %s514
        %v519 = vmul.f32 %v518, %v515
        %v520 = vmul.f32 %v518, %v516
        %v521 = vmul.f32 %v518, %v517
        %v522 = vadd.f32 %v519, 0.0
        %v523 = vadd.f32 %v520, 0.0
        %v524 = vadd.f32 %v521, 0.0
        %s525 = sadd.s32 %s513, 1
        %s526 = sld [smem:[#allocation6 + %s525]]
        %v527 = vld [vmem:[%s306] sm:$0xff]
        %v528 = vld [vmem:[%s306 + $0x8] sm:$0xff]
        %v529 = vld [vmem:[%s306 + $0x10] sm:$0x3]
        %v530 = vstv %s526
        %v531 = vmul.f32 %v530, %v527
        %v532 = vmul.f32 %v530, %v528
        %v533 = vmul.f32 %v530, %v529
        %v534 = vadd.f32 %v522, %v531
        %v535 = vadd.f32 %v523, %v532
        %v536 = vadd.f32 %v524, %v533
        %s537 = sadd.s32 %s513, 2
        %s538 = sld [smem:[#allocation6 + %s537]]
        %v539 = vld [vmem:[%s319] sm:$0xff]
        %v540 = vld [vmem:[%s319 + $0x8] sm:$0xff]
        %v541 = vld [vmem:[%s319 + $0x10] sm:$0x3]
        %v542 = vstv %s538
        %v543 = vmul.f32 %v542, %v539
        %v544 = vmul.f32 %v542, %v540
        %v545 = vmul.f32 %v542, %v541
        %v546 = vadd.f32 %v534, %v543
        %v547 = vadd.f32 %v535, %v544
        %v548 = vadd.f32 %v536, %v545
        %s549 = sld [smem:[#allocation7 + %s512]]
        %v550 = vstv %s549
        %v551 = vadd.f32 %v546, %v550
        %v552 = vadd.f32 %v547, %v550
        %v553 = vadd.f32 %v548, %v550
        %v554 = vmul.f32 %v551, 0.5
        %v555 = vmul.f32 %v552, 0.5
        %v556 = vmul.f32 %v553, 0.5
        %vm557 = vcmp.ne.f32.partialorder %v554, 0.0
        %vm558 = vcmp.ne.f32.partialorder %v555, 0.0
        %vm559 = vcmp.ne.f32.partialorder %v556, 0.0
        %v560 = vsel %vm557, %v551, 0.0
        %v561 = vsel %vm558, %v552, 0.0
        %v562 = vsel %vm559, %v553, 0.0
        %s563 = scalar_lea.vmem %s241, 96
        %564 = vst.msk [vmem:[%s563] sm:$0xff] %vm243, %v560
        %565 = vst.msk [vmem:[%s563 + $0x8] sm:$0xff] %vm243, %v561
        %566 = vst.msk [vmem:[%s563 + $0x10] sm:$0x3] %vm246, %v562
        %s567 = sadd.s32 %s291, 5
        %s568 = smul.u32 %s567, 128
        %s569 = sld [smem:[#allocation6 + %s568]]
        %v570 = vld [vmem:[#allocation2] sm:$0xff]
        %v571 = vld [vmem:[#allocation2 + $0x8] sm:$0xff]
        %v572 = vld [vmem:[#allocation2 + $0x10] sm:$0x3]
        %v573 = vstv %s569
        %v574 = vmul.f32 %v573, %v570
        %v575 = vmul.f32 %v573, %v571
        %v576 = vmul.f32 %v573, %v572
        %v577 = vadd.f32 %v574, 0.0
        %v578 = vadd.f32 %v575, 0.0
        %v579 = vadd.f32 %v576, 0.0
        %s580 = sadd.s32 %s568, 1
        %s581 = sld [smem:[#allocation6 + %s580]]
        %v582 = vld [vmem:[%s306] sm:$0xff]
        %v583 = vld [vmem:[%s306 + $0x8] sm:$0xff]
        %v584 = vld [vmem:[%s306 + $0x10] sm:$0x3]
        %v585 = vstv %s581
        %v586 = vmul.f32 %v585, %v582
        %v587 = vmul.f32 %v585, %v583
        %v588 = vmul.f32 %v585, %v584
        %v589 = vadd.f32 %v577, %v586
        %v590 = vadd.f32 %v578, %v587
        %v591 = vadd.f32 %v579, %v588
        %s592 = sadd.s32 %s568, 2
        %s593 = sld [smem:[#allocation6 + %s592]]
        %v594 = vld [vmem:[%s319] sm:$0xff]
        %v595 = vld [vmem:[%s319 + $0x8] sm:$0xff]
        %v596 = vld [vmem:[%s319 + $0x10] sm:$0x3]
        %v597 = vstv %s593
        %v598 = vmul.f32 %v597, %v594
        %v599 = vmul.f32 %v597, %v595
        %v600 = vmul.f32 %v597, %v596
        %v601 = vadd.f32 %v589, %v598
        %v602 = vadd.f32 %v590, %v599
        %v603 = vadd.f32 %v591, %v600
        %s604 = sld [smem:[#allocation7 + %s567]]
        %v605 = vstv %s604
        %v606 = vadd.f32 %v601, %v605
        %v607 = vadd.f32 %v602, %v605
        %v608 = vadd.f32 %v603, %v605
        %v609 = vmul.f32 %v606, 0.5
        %v610 = vmul.f32 %v607, 0.5
        %v611 = vmul.f32 %v608, 0.5
        %vm612 = vcmp.ne.f32.partialorder %v609, 0.0
        %vm613 = vcmp.ne.f32.partialorder %v610, 0.0
        %vm614 = vcmp.ne.f32.partialorder %v611, 0.0
        %v615 = vsel %vm612, %v606, 0.0
        %v616 = vsel %vm613, %v607, 0.0
        %v617 = vsel %vm614, %v608, 0.0
        %s618 = scalar_lea.vmem %s241, 120
        %619 = vst.msk [vmem:[%s618] sm:$0xff] %vm243, %v615
        %620 = vst.msk [vmem:[%s618 + $0x8] sm:$0xff] %vm243, %v616
        %621 = vst.msk [vmem:[%s618 + $0x10] sm:$0x3] %vm246, %v617
        %s622 = sadd.s32 %s291, 6
        %s623 = smul.u32 %s622, 128
        %s624 = sld [smem:[#allocation6 + %s623]]
        %v625 = vld [vmem:[#allocation2] sm:$0xff]
        %v626 = vld [vmem:[#allocation2 + $0x8] sm:$0xff]
        %v627 = vld [vmem:[#allocation2 + $0x10] sm:$0x3]
        %v628 = vstv %s624
        %v629 = vmul.f32 %v628, %v625
        %v630 = vmul.f32 %v628, %v626
        %v631 = vmul.f32 %v628, %v627
        %v632 = vadd.f32 %v629, 0.0
        %v633 = vadd.f32 %v630, 0.0
        %v634 = vadd.f32 %v631, 0.0
        %s635 = sadd.s32 %s623, 1
        %s636 = sld [smem:[#allocation6 + %s635]]
        %v637 = vld [vmem:[%s306] sm:$0xff]
        %v638 = vld [vmem:[%s306 + $0x8] sm:$0xff]
        %v639 = vld [vmem:[%s306 + $0x10] sm:$0x3]
        %v640 = vstv %s636
        %v641 = vmul.f32 %v640, %v637
        %v642 = vmul.f32 %v640, %v638
        %v643 = vmul.f32 %v640, %v639
        %v644 = vadd.f32 %v632, %v641
        %v645 = vadd.f32 %v633, %v642
        %v646 = vadd.f32 %v634, %v643
        %s647 = sadd.s32 %s623, 2
        %s648 = sld [smem:[#allocation6 + %s647]]
        %v649 = vld [vmem:[%s319] sm:$0xff]
        %v650 = vld [vmem:[%s319 + $0x8] sm:$0xff]
        %v651 = vld [vmem:[%s319 + $0x10] sm:$0x3]
        %v652 = vstv %s648
        %v653 = vmul.f32 %v652, %v649
        %v654 = vmul.f32 %v652, %v650
        %v655 = vmul.f32 %v652, %v651
        %v656 = vadd.f32 %v644, %v653
        %v657 = vadd.f32 %v645, %v654
        %v658 = vadd.f32 %v646, %v655
        %s659 = sld [smem:[#allocation7 + %s622]]
        %v660 = vstv %s659
        %v661 = vadd.f32 %v656, %v660
        %v662 = vadd.f32 %v657, %v660
        %v663 = vadd.f32 %v658, %v660
        %v664 = vmul.f32 %v661, 0.5
        %v665 = vmul.f32 %v662, 0.5
        %v666 = vmul.f32 %v663, 0.5
        %vm667 = vcmp.ne.f32.partialorder %v664, 0.0
        %vm668 = vcmp.ne.f32.partialorder %v665, 0.0
        %vm669 = vcmp.ne.f32.partialorder %v666, 0.0
        %v670 = vsel %vm667, %v661, 0.0
        %v671 = vsel %vm668, %v662, 0.0
        %v672 = vsel %vm669, %v663, 0.0
        %s673 = scalar_lea.vmem %s241, 144
        %674 = vst.msk [vmem:[%s673] sm:$0xff] %vm243, %v670
        %675 = vst.msk [vmem:[%s673 + $0x8] sm:$0xff] %vm243, %v671
        %676 = vst.msk [vmem:[%s673 + $0x10] sm:$0x3] %vm246, %v672
        %s677 = sadd.s32 %s291, 7
        %s678 = smul.u32 %s677, 128
        %s679 = sld [smem:[#allocation6 + %s678]]
        %v680 = vld [vmem:[#allocation2] sm:$0xff]
        %v681 = vld [vmem:[#allocation2 + $0x8] sm:$0xff]
        %v682 = vld [vmem:[#allocation2 + $0x10] sm:$0x3]
        %v683 = vstv %s679
        %v684 = vmul.f32 %v683, %v680
        %v685 = vmul.f32 %v683, %v681
        %v686 = vmul.f32 %v683, %v682
        %v687 = vadd.f32 %v684, 0.0
        %v688 = vadd.f32 %v685, 0.0
        %v689 = vadd.f32 %v686, 0.0
        %s690 = sadd.s32 %s678, 1
        %s691 = sld [smem:[#allocation6 + %s690]]
        %v692 = vld [vmem:[%s306] sm:$0xff]
        %v693 = vld [vmem:[%s306 + $0x8] sm:$0xff]
        %v694 = vld [vmem:[%s306 + $0x10] sm:$0x3]
        %v695 = vstv %s691
        %v696 = vmul.f32 %v695, %v692
        %v697 = vmul.f32 %v695, %v693
        %v698 = vmul.f32 %v695, %v694
        %v699 = vadd.f32 %v687, %v696
        %v700 = vadd.f32 %v688, %v697
        %v701 = vadd.f32 %v689, %v698
        %s702 = sadd.s32 %s678, 2
        %s703 = sld [smem:[#allocation6 + %s702]]
        %v704 = vld [vmem:[%s319] sm:$0xff]
        %v705 = vld [vmem:[%s319 + $0x8] sm:$0xff]
        %v706 = vld [vmem:[%s319 + $0x10] sm:$0x3]
        %v707 = vstv %s703
        %v708 = vmul.f32 %v707, %v704
        %v709 = vmul.f32 %v707, %v705
        %v710 = vmul.f32 %v707, %v706
        %v711 = vadd.f32 %v699, %v708
        %v712 = vadd.f32 %v700, %v709
        %v713 = vadd.f32 %v701, %v710
        %s714 = sld [smem:[#allocation7 + %s677]]
        %v715 = vstv %s714
        %v716 = vadd.f32 %v711, %v715
        %v717 = vadd.f32 %v712, %v715
        %v718 = vadd.f32 %v713, %v715
        %v719 = vmul.f32 %v716, 0.5
        %v720 = vmul.f32 %v717, 0.5
        %v721 = vmul.f32 %v718, 0.5
        %vm722 = vcmp.ne.f32.partialorder %v719, 0.0
        %vm723 = vcmp.ne.f32.partialorder %v720, 0.0
        %vm724 = vcmp.ne.f32.partialorder %v721, 0.0
        %v725 = vsel %vm722, %v716, 0.0
        %v726 = vsel %vm723, %v717, 0.0
        %v727 = vsel %vm724, %v718, 0.0
        %s728 = scalar_lea.vmem %s241, 168
        %729 = vst.msk [vmem:[%s728] sm:$0xff] %vm243, %v725
        %730 = vst.msk [vmem:[%s728 + $0x8] sm:$0xff] %vm243, %v726
        %731 = vst.msk [vmem:[%s728 + $0x10] sm:$0x3] %vm246, %v727
        %s732 = smul.u32 8, %s24
        %p733 = scmp.lt.s32.totalorder %s23, 1
        %s734 = scalar_select %p733, %s23, 1
        %p735 = scmp.lt.s32.totalorder %s732, 7
        %s736 = scalar_select %p735, %s732, 7
        %s737 = smul.addr %s736, 3
        %s738 = smul.addr %s734, 24
        %s739 = sadd.s32 %s737, %s738
        %s740 = smul.addr %s739, 8
        %s741 = scalar_lea.vmem %s3, %s740
        // Predicated region
        $region45: #{tpu_custom_call.1} parent=31 // pred_check
          %p742 = pneg %p119
        $region46: #{tpu_custom_call.1} parent=31 // pred_check_branch
          %744 = sbr.rel (%p742) target = $region48
        $region47: #{tpu_custom_call.1} parent=31 // pred_region
          %s745 = smul.u32 8, %s24
        $region48: #{tpu_custom_call.1} parent=31 // pred_fallthru
          _
      $region32: #{tpu_custom_call.1} parent=5 // pred_fallthru
        _
      %p746 = scmp.le.s32.totalorder 2, %s14
      // Predicated region
      $region49: #{tpu_custom_call.1} parent=5 // pred_check
        %p747 = pneg %p746
      $region50: #{tpu_custom_call.1} parent=5 // pred_check_branch
        %749 = sbr.rel (%p747) target = $region52
      $region51: #{tpu_custom_call.1} parent=5 // pred_region
        %s750 = ssub.s32 %s14, 2
        // Predicated region
        $region53: #{tpu_custom_call.1} parent=51 // pred_check
          %p751 = pneg %p125
        $region54: #{tpu_custom_call.1} parent=51 // pred_check_branch
          %753 = sbr.rel (%p751) target = $region56
        $region55: #{tpu_custom_call.1} parent=51 // pred_region
          %s754 = smul.u32 8, %s26
          %p755 = scmp.lt.s32.totalorder %s25, 1
          %s756 = scalar_select %p755, %s25, 1
          %p757 = scmp.lt.s32.totalorder %s754, 7
          %s758 = scalar_select %p757, %s754, 7
          %s759 = smul.addr %s758, 3
          %s760 = smul.addr %s756, 24
          %s761 = sadd.s32 %s759, %s760
          %s762 = smul.addr %s761, 8
          %s763 = scalar_lea.vmem %s3, %s762
        $region56: #{tpu_custom_call.1} parent=51 // pred_fallthru
          _
      $region52: #{tpu_custom_call.1} parent=5 // pred_fallthru
        _
    $region6: #{tpu_custom_call.1} parent=1 // loop_footer
      %s18 = sadd.s32 1, %s14
    $region7: #{tpu_custom_call.1} parent=1 // loop_footer_branch
      %13 = sbr.rel target = $region3
    $region8: #{tpu_custom_call.1} parent=1 // loop_exit
      _
    %764 = vsyncpa [#allocation4], 1
    %s765 = scalar_lea.sflag [#allocation4], 1
    %766 = vsyncpa %s765, 1
    %767 = vsyncpa [#allocation5], 1
    %s768 = scalar_lea.sflag [#allocation5], 1
    %769 = vsyncpa %s768, 1
    %770 = vsyncpa [#allocation8], 1

</llo_original>
